<compile_context>
chip_gen: v7x
topology: tpu7x:2x2x1
jax: 0.10.0
libtpu: 0.0.40
codegen_flags: <defaults>
</compile_context>

<pallas_src>
import functools

import jax
import jax.numpy as jnp
from jax.experimental import pallas as pl
from jax.experimental.pallas import tpu as pltpu


def _round_up(v, m):
    return ((v + m - 1) // m) * m


def _cdiv(a, b):
    return -(-a // b)


def _sublane_multiple(dtype):
    # f32 -> 8 sublanes, bf16 -> 16, int8/fp8 -> 32.
    return max(8, 32 // jnp.dtype(dtype).itemsize)


def _pick_tile(dim, multiple, max_tile):
    """Balanced tile <= max_tile (in units of `multiple`) minimizing padding waste."""
    max_tile = max(_round_up(max_tile, multiple), multiple)
    dim_p = _round_up(dim, multiple)
    if dim_p <= max_tile:
        return dim_p
    n_blocks = _cdiv(dim_p, max_tile)
    return _round_up(_cdiv(dim_p, n_blocks), multiple)


def _vmem_capacity_bytes(default=128 * 1024 * 1024):
    try:
        return int(pltpu.get_tpu_info().vmem_capacity_bytes)
    except Exception:  # interpret mode / older jax: assume v5e/v6e capacity
        return default


def _equal_linear_kernel_single_k(x_ref, w_ref, b_ref, o_ref, *, lr_mul):
    # Whole K fits in one block: no accumulator scratch, no pl.when guards.
    acc = jnp.dot(x_ref[...], w_ref[...], preferred_element_type=jnp.float32)
    o_ref[...] = ((acc + b_ref[...]) * lr_mul).astype(o_ref.dtype)


def _equal_linear_kernel_multi_k(x_ref, w_ref, b_ref, o_ref, acc_ref, *, lr_mul):
    k = pl.program_id(2)
    partial_dot = jnp.dot(x_ref[...], w_ref[...], preferred_element_type=jnp.float32)

    @pl.when(k == 0)
    def _():
        # Direct write on the first K step (no zero-fill + RMW).
        acc_ref[...] = partial_dot

    @pl.when(k > 0)
    def _():
        acc_ref[...] += partial_dot

    @pl.when(k == pl.num_programs(2) - 1)
    def _():
        # y = (x @ W.T) * lr_mul + bias * lr_mul  ==  (acc + bias) * lr_mul
        o_ref[...] = ((acc_ref[...] + b_ref[...]) * lr_mul).astype(o_ref.dtype)


def equal_linear(x, weight, bias, lr_mul=1.0, *, tm=512, tn=512, tk=1024,
                 transposed_weight=False, allow_fallback=True):
    """Pallas implementation of EqualLinear.forward.

    x:      (..., in_dim)
    weight: (out_dim, in_dim) PyTorch layout, or (in_dim, out_dim) if
            transposed_weight=True (avoids a per-call HBM transpose).
    bias:   (out_dim,)
    lr_mul: static Python float (baked into the kernel).
    """
    lr_mul = float(lr_mul)
    *lead, in_dim = x.shape
    x2 = x.reshape(-1, in_dim)
    M, K = x2.shape

    if transposed_weight:
        k_w, out_dim = weight.shape
        w_t = weight
    else:
        out_dim, k_w = weight.shape
        w_t = weight.T  # one-time layout plumbing; never per-tile in kernel
    assert K == k_w, (K, k_w)

    # Tiny problems: launch/pad overhead dominates the FLOPs.
    if allow_fallback and (M * K * out_dim) < (1 << 21):
        out = (x2 @ w_t + bias[None, :]) * lr_mul
        return out.reshape(*lead, out_dim).astype(x.dtype)

    sub_m = _sublane_multiple(x.dtype)

    # Balanced tile sizes (dtype-aware on M; lane dims in multiples of 128).
    tm = _pick_tile(M, sub_m, tm)
    tn = _pick_tile(out_dim, 128, tn)
    tk = _pick_tile(K, 128, tk)

    m_p = _round_up(M, tm)
    n_p = _round_up(out_dim, tn)
    k_p = _round_up(K, tk)

    x_p = x2 if (m_p == M and k_p == K) else jnp.pad(
        x2, ((0, m_p - M), (0, k_p - K)))
    w_p = w_t if (k_p == K and n_p == out_dim) else jnp.pad(
        w_t, ((0, k_p - K), (0, n_p - out_dim)))
    b_p = bias if n_p == out_dim else jnp.pad(bias, (0, n_p - out_dim))
    b_p = b_p.reshape(1, n_p)

    k_steps = k_p // tk
    in_bytes = jnp.dtype(x.dtype).itemsize
    w_bytes = jnp.dtype(w_p.dtype).itemsize
    b_bytes = jnp.dtype(b_p.dtype).itemsize

    # Double-buffered inputs/outputs (+ resident f32 accumulator if K-tiled).
    footprint = (2 * tm * tk * in_bytes + 2 * tk * tn * w_bytes
                 + 2 * tn * b_bytes + 2 * tm * tn * in_bytes)
    if k_steps > 1:
        footprint += 4 * tm * tn
    vmem_cap = max(32 * 1024 * 1024, int(0.75 * _vmem_capacity_bytes()))
    vmem_limit = int(min(max(2 * footprint, 32 * 1024 * 1024), vmem_cap))

    cost = pl.CostEstimate(
        flops=2 * M * K * out_dim,
        transcendentals=0,
        bytes_accessed=(M * K * in_bytes + K * out_dim * w_bytes
                        + M * out_dim * in_bytes + out_dim * b_bytes),
    )

    if k_steps == 1:
        # Common EqualLinear case: single K block, no accumulator scratch.
        kernel = functools.partial(_equal_linear_kernel_single_k, lr_mul=lr_mul)
        grid_spec = pltpu.PrefetchScalarGridSpec(
            num_scalar_prefetch=0,
            grid=(m_p // tm, n_p // tn),
            in_specs=[
                pl.BlockSpec((tm, k_p), lambda i, j: (i, 0)),
                pl.BlockSpec((k_p, tn), lambda i, j: (0, j)),
                pl.BlockSpec((1, tn), lambda i, j: (0, j)),
            ],
            out_specs=pl.BlockSpec((tm, tn), lambda i, j: (i, j)),
        )
        dim_sem = ("parallel", "parallel")
    else:
        kernel = functools.partial(_equal_linear_kernel_multi_k, lr_mul=lr_mul)
        grid_spec = pltpu.PrefetchScalarGridSpec(
            num_scalar_prefetch=0,
            grid=(m_p // tm, n_p // tn, k_steps),
            in_specs=[
                pl.BlockSpec((tm, tk), lambda i, j, k: (i, k)),
                pl.BlockSpec((tk, tn), lambda i, j, k: (k, j)),
                pl.BlockSpec((1, tn), lambda i, j, k: (0, j)),
            ],
            out_specs=pl.BlockSpec((tm, tn), lambda i, j, k: (i, j)),
            scratch_shapes=[pltpu.VMEM((tm, tn), jnp.float32)],
        )
        dim_sem = ("parallel", "parallel", "arbitrary")

    out_p = pl.pallas_call(
        kernel,
        out_shape=jax.ShapeDtypeStruct((m_p, n_p), x.dtype),
        grid_spec=grid_spec,
        compiler_params=pltpu.CompilerParams(
            dimension_semantics=dim_sem,
            vmem_limit_bytes=vmem_limit,
        ),
        cost_estimate=cost,
    )(x_p, w_p, b_p)

    out = out_p[:M, :out_dim]
    return out.reshape(*lead, out_dim)


if __name__ == "__main__":
    key = jax.random.PRNGKey(0)
    k1, k2, k3, k4, k5 = jax.random.split(key, 5)

    def ref(x, w, b, lr_mul):
        return x @ (w * lr_mul).T + b * lr_mul

    # Case 1: module-faithful tiny EqualLinear (randn weight, zeros bias).
    # allow_fallback=False forces the single-K Pallas kernel path.
    batch, in_dim, out_dim = 8, 32, 32
    lr_mul = 0.5
    x = jax.random.normal(k1, (batch, in_dim), dtype=jnp.float32)
    w = jax.random.normal(k2, (out_dim, in_dim), dtype=jnp.float32)
    b = jnp.zeros((out_dim,), dtype=jnp.float32)
    y = jax.block_until_ready(equal_linear(x, w, b, lr_mul, allow_fallback=False))
    assert y.shape == (batch, out_dim)
    assert jnp.allclose(y, ref(x, w, b, lr_mul), atol=1e-5, rtol=1e-5)

    # Case 2: leading batch dims + non-multiple-of-128 dims (padding path).
    x2_ = jax.random.normal(k3, (2, 3, 64), dtype=jnp.float32)
    w2_ = jax.random.normal(k4, (96, 64), dtype=jnp.float32)
    b2_ = jax.random.normal(k5, (96,), dtype=jnp.float32)
    y2 = jax.block_until_ready(equal_linear(x2_, w2_, b2_, 0.25, allow_fallback=False))
    assert y2.shape == (2, 3, 96)
    y2_ref = ref(x2_.reshape(-1, 64), w2_, b2_, 0.25).reshape(2, 3, 96)
    assert jnp.allclose(y2, y2_ref, atol=1e-5, rtol=1e-5)

    # Case 3: force K tiling (tk=128, K=256) to exercise the multi-K kernel.
    kx, kw, kb = jax.random.split(k1, 3)
    x3_ = jax.random.normal(kx, (16, 256), dtype=jnp.float32)
    w3_ = jax.random.normal(kw, (192, 256), dtype=jnp.float32)
    b3_ = jax.random.normal(kb, (192,), dtype=jnp.float32)
    y3 = jax.block_until_ready(
        equal_linear(x3_, w3_, b3_, 1.0, tk=128, allow_fallback=False))
    assert y3.shape == (16, 192)
    assert jnp.allclose(y3, ref(x3_, w3_, b3_, 1.0), atol=1e-4, rtol=1e-4)

    print("KERNEL_OK")
</pallas_src>

<mosaic_0001>
module attributes {stable_mosaic.version = 11 : i64} {
  func.func @_equal_linear_kernel_single_k(%arg0: i32, %arg1: i32, %arg2: memref<8x128xf32, #tpu.memory_space<vmem>>, %arg3: memref<128x128xf32, #tpu.memory_space<vmem>>, %arg4: memref<1x128xf32, #tpu.memory_space<vmem>>, %arg5: memref<8x128xf32, #tpu.memory_space<vmem>>) attributes {dimension_semantics = [#tpu.dimension_semantics<parallel>, #tpu.dimension_semantics<parallel>], iteration_bounds = array<i64: 1, 1>, scalar_prefetch = 0 : i64, scratch_operands = 0 : i64, tpu.core_type = #tpu.core_type<tc>, window_params = [{transform_indices = @transform_0, window_bounds = array<i64: 8, 128>}, {transform_indices = @transform_1, window_bounds = array<i64: 128, 128>}, {transform_indices = @transform_2, window_bounds = array<i64: 1, 128>}, {transform_indices = @transform_3, window_bounds = array<i64: 8, 128>}]} {
    %c0 = arith.constant 0 : index
    %c0_0 = arith.constant 0 : index
    %0 = vector.load %arg2[%c0, %c0_0] : memref<8x128xf32, #tpu.memory_space<vmem>>, vector<8x128xf32>
    %c0_1 = arith.constant 0 : index
    %c0_2 = arith.constant 0 : index
    %1 = vector.load %arg3[%c0_1, %c0_2] : memref<128x128xf32, #tpu.memory_space<vmem>>, vector<128x128xf32>
    %cst = arith.constant dense<0.000000e+00> : vector<8x128xf32>
    %2 = tpu.matmul %0, %1, %cst {dimension_numbers = #tpu.dot_dimension_numbers<[1], [0], [0], [1], [0, 0, 1, 1], [], []>} : vector<8x128xf32>, vector<128x128xf32>, vector<8x128xf32> -> vector<8x128xf32>
    %c0_3 = arith.constant 0 : index
    %c0_4 = arith.constant 0 : index
    %3 = vector.load %arg4[%c0_3, %c0_4] : memref<1x128xf32, #tpu.memory_space<vmem>>, vector<1x128xf32>
    %4 = vector.broadcast %3 : vector<1x128xf32> to vector<8x128xf32>
    %5 = arith.addf %2, %4 : vector<8x128xf32>
    %cst_5 = arith.constant 5.000000e-01 : f32
    %6 = vector.broadcast %cst_5 : f32 to vector<8x128xf32>
    %7 = arith.mulf %5, %6 : vector<8x128xf32>
    %c0_6 = arith.constant 0 : index
    %c0_7 = arith.constant 0 : index
    %8 = vector.load %arg5[%c0_6, %c0_7] : memref<8x128xf32, #tpu.memory_space<vmem>>, vector<8x128xf32>
    tpu.vector_store %arg5[%c0_6, %c0_7], %7 {strides = array<i32>} : memref<8x128xf32, #tpu.memory_space<vmem>>, vector<8x128xf32>,
    return
  }
  func.func @transform_0(%arg0: i32, %arg1: i32) -> (i32, i32) {
    %c0_i32 = arith.constant 0 : i32
    %c0_i32_0 = arith.constant 0 : i32
    return %arg0, %c0_i32 : i32, i32
  }
  func.func @transform_1(%arg0: i32, %arg1: i32) -> (i32, i32) {
    %c0_i32 = arith.constant 0 : i32
    %c0_i32_0 = arith.constant 0 : i32
    return %c0_i32, %arg1 : i32, i32
  }
  func.func @transform_2(%arg0: i32, %arg1: i32) -> (i32, i32) {
    %c0_i32 = arith.constant 0 : i32
    %c0_i32_0 = arith.constant 0 : i32
    return %c0_i32, %arg1 : i32, i32
  }
  func.func @transform_3(%arg0: i32, %arg1: i32) -> (i32, i32) {
    %c0_i32 = arith.constant 0 : i32
    return %arg0, %arg1 : i32, i32
  }
}

</mosaic_0001>

<llo_original>
// kernel: tpu_custom_call.1
$region0: #{tpu_custom_call.1}
  #allocation0 [shape = 'u32[]', space=smem, size = 0x4, offset = 0x4, fixed_abs, tag = 'smem constant byte address 0x4 - core index']
  #allocation1 [shape = 'u32[144,128]{1,0:T(1,128)}', space=vmem, size = 0x12000, scoped, tag = 'internal scratch']
  %s0 = inlined_call_operand.hbm [shape: f32[8,128], index: 0, kind: input, shape index: {}]
  %s1 = inlined_call_operand.hbm [shape: f32[128,128], index: 1, kind: input, shape index: {}]
  %s2 = inlined_call_operand.vmem [shape: f32[1,128], index: 2, kind: input, shape index: {}]
  %s3 = inlined_call_operand.hbm [shape: f32[8,128], index: 3, kind: output, shape index: {}]
  %s4 = sld [smem:[#allocation0]]
  $region30: #{tpu_custom_call.1} parent=0
    _
  %s6 = ssub.s32 1, %s4
  %s7 = scalar_select 0, %s6, %s4
  $region1: #{tpu_custom_call.1} parent=0
    #allocation2 [shape = 'u8[4096]{0}', space=vmem, size = 0x1000, scoped, tag = 'input window, operand 0, single buffered']
    #allocation3 [shape = 's32[1]{0}', space=sflag, size = 0x4, scoped, tag = 'scoped memory for tpu_custom_call.1']
    #allocation4 [shape = 's32[1]{0}', space=sflag, size = 0x4, scoped, tag = 'scoped memory for tpu_custom_call.1']
    #allocation5 [shape = 'u8[65536]{0}', space=vmem, size = 0x10000, scoped, tag = 'input window, operand 1, single buffered']
    #allocation6 [shape = 's32[1]{0}', space=sflag, size = 0x4, scoped, tag = 'scoped memory for tpu_custom_call.1']
    #allocation7 [shape = 'u8[4096]{0}', space=vmem, size = 0x1000, scoped, tag = 'output window, operand 0, single buffered']
    %8 = vsyncpa [#allocation3], 0
    %9 = vsyncpa [#allocation6], 0
    %10 = vsyncpa [#allocation4], 0
    // Predicated region
    $region2: #{tpu_custom_call.1} parent=1 // pred_check
      _
    $region3: #{tpu_custom_call.1} parent=1 // pred_check_branch
      %12 = sbr.rel (0) target = $region5
    $region4: #{tpu_custom_call.1} parent=1 // pred_region
      %s14 = ssub.s32 128, 128
      %15 = vsyncadd [#allocation3], %s14
      %s17 = sshll.u32 [#allocation2], 4
      %s18 = int_to_ptr.vmem [resolvable:$true] %s17
      %20 = dma.hbm_to_vmem [thread:$0]  %s0, 128, %s18, [#allocation3]
    $region5: #{tpu_custom_call.1} parent=1 // pred_fallthru
      _
    // Predicated region
    $region6: #{tpu_custom_call.1} parent=1 // pred_check
      _
    $region7: #{tpu_custom_call.1} parent=1 // pred_check_branch
      %22 = sbr.rel (0) target = $region9
    $region8: #{tpu_custom_call.1} parent=1 // pred_region
      %s24 = ssub.s32 2048, 2048
      %25 = vsyncadd [#allocation6], %s24
      %s26 = sshll.u32 [#allocation5], 4
      %s27 = int_to_ptr.vmem [resolvable:$true] %s26
      %32 = dma.hbm_to_vmem [thread:$0]  %s1, 2048, %s27, [#allocation6], 128, 128, 8
    $region9: #{tpu_custom_call.1} parent=1 // pred_fallthru
      _
    // Predicated region
    $region10: #{tpu_custom_call.1} parent=1 // pred_check
      _
    $region11: #{tpu_custom_call.1} parent=1 // pred_check_branch
      %34 = sbr.rel (0) target = $region13
    $region12: #{tpu_custom_call.1} parent=1 // pred_region
      _
    $region13: #{tpu_custom_call.1} parent=1 // pred_fallthru
      _
    // Predicated region
    $region14: #{tpu_custom_call.1} parent=1 // pred_check
      _
    $region15: #{tpu_custom_call.1} parent=1 // pred_check_branch
      %36 = sbr.rel (0) target = $region17
    $region16: #{tpu_custom_call.1} parent=1 // pred_region
      %37 = dma.done [#allocation3], 128
    $region17: #{tpu_custom_call.1} parent=1 // pred_fallthru
      _
    // Predicated region
    $region18: #{tpu_custom_call.1} parent=1 // pred_check
      _
    $region19: #{tpu_custom_call.1} parent=1 // pred_check_branch
      %39 = sbr.rel (0) target = $region21
    $region20: #{tpu_custom_call.1} parent=1 // pred_region
      %40 = dma.done [#allocation6], 2048
    $region21: #{tpu_custom_call.1} parent=1 // pred_fallthru
      _
    %v41 = vld [vmem:[#allocation2] sm:$0xff]
    %v42 = vld [vmem:[#allocation5] sm:$0xff]
    %v43 = vld [vmem:[#allocation5 + $0x8] sm:$0xff]
    %v44 = vld [vmem:[#allocation5 + $0x10] sm:$0xff]
    %v45 = vld [vmem:[#allocation5 + $0x18] sm:$0xff]
    %v46 = vld [vmem:[#allocation5 + $0x20] sm:$0xff]
    %v47 = vld [vmem:[#allocation5 + $0x28] sm:$0xff]
    %v48 = vld [vmem:[#allocation5 + $0x30] sm:$0xff]
    %v49 = vld [vmem:[#allocation5 + $0x38] sm:$0xff]
    %v50 = vld [vmem:[#allocation5 + $0x40] sm:$0xff]
    %v51 = vld [vmem:[#allocation5 + $0x48] sm:$0xff]
    %v52 = vld [vmem:[#allocation5 + $0x50] sm:$0xff]
    %v53 = vld [vmem:[#allocation5 + $0x58] sm:$0xff]
    %v54 = vld [vmem:[#allocation5 + $0x60] sm:$0xff]
    %v55 = vld [vmem:[#allocation5 + $0x68] sm:$0xff]
    %v56 = vld [vmem:[#allocation5 + $0x70] sm:$0xff]
    %v57 = vld [vmem:[#allocation5 + $0x78] sm:$0xff]
    %v58 = vld [vmem:[%s2] sm:$0x1]
    %v60 = vlaneseq
    %v61 = vshrl.u32 %v60, 7
    %v62 = vsub.s32 0, %v61
    %v63 = vrot.slane %v58, %v62
    %65 = vmatprep.subr.mxu0 0.0
    %66 = vmatpush1.msra.mxu0 %v42
    %67 = vmatprep.subr.mxu0 0.0
    %68 = vmatpush1.msra.mxu0 %v43
    %69 = vmatprep.subr.mxu0 0.0
    %70 = vmatpush1.msra.mxu0 %v44
    %71 = vmatprep.subr.mxu0 0.0
    %72 = vmatpush1.msra.mxu0 %v45
    %73 = vmatprep.subr.mxu0 0.0
    %74 = vmatpush1.msra.mxu0 %v46
    %75 = vmatprep.subr.mxu0 0.0
    %76 = vmatpush1.msra.mxu0 %v47
    %77 = vmatprep.subr.mxu0 0.0
    %78 = vmatpush1.msra.mxu0 %v48
    %79 = vmatprep.subr.mxu0 0.0
    %80 = vmatpush1.msra.mxu0 %v49
    %81 = vmatprep.subr.mxu0 0.0
    %82 = vmatpush1.msra.mxu0 %v50
    %83 = vmatprep.subr.mxu0 0.0
    %84 = vmatpush1.msra.mxu0 %v51
    %85 = vmatprep.subr.mxu0 0.0
    %86 = vmatpush1.msra.mxu0 %v52
    %87 = vmatprep.subr.mxu0 0.0
    %88 = vmatpush1.msra.mxu0 %v53
    %89 = vmatprep.subr.mxu0 0.0
    %90 = vmatpush1.msra.mxu0 %v54
    %91 = vmatprep.subr.mxu0 0.0
    %92 = vmatpush1.msra.mxu0 %v55
    %93 = vmatprep.subr.mxu0 0.0
    %94 = vmatpush1.msra.mxu0 %v56
    %95 = vmatprep.subr.mxu0 0.0
    %96 = vmatpush1.msra.mxu0 %v57
    %97 = vmatprep.subr.mxu0 0.0
    %98 = vmatpush1.msra.mxu0 0.0
    %99 = vmatprep.subr.mxu0 0.0
    %100 = vmatpush1.msra.mxu0 0.0
    %101 = vmatprep.subr.mxu0 0.0
    %102 = vmatpush1.msra.mxu0 0.0
    %103 = vmatprep.subr.mxu0 0.0
    %104 = vmatpush1.msra.mxu0 0.0
    %105 = vmatprep.subr.mxu0 0.0
    %106 = vmatpush1.msra.mxu0 0.0
    %107 = vmatprep.subr.mxu0 0.0
    %108 = vmatpush1.msra.mxu0 0.0
    %109 = vmatprep.subr.mxu0 0.0
    %110 = vmatpush1.msra.mxu0 0.0
    %111 = vmatprep.subr.mxu0 0.0
    %112 = vmatpush1.msra.mxu0 0.0
    %113 = vmatprep.subr.mxu0 0.0
    %114 = vmatpush1.msra.mxu0 0.0
    %115 = vmatprep.subr.mxu0 0.0
    %116 = vmatpush1.msra.mxu0 0.0
    %117 = vmatprep.subr.mxu0 0.0
    %118 = vmatpush1.msra.mxu0 0.0
    %119 = vmatprep.subr.mxu0 0.0
    %120 = vmatpush1.msra.mxu0 0.0
    %121 = vmatprep.subr.mxu0 0.0
    %122 = vmatpush1.msra.mxu0 0.0
    %123 = vmatprep.subr.mxu0 0.0
    %124 = vmatpush1.msra.mxu0 0.0
    %125 = vmatprep.subr.mxu0 0.0
    %126 = vmatpush1.msra.mxu0 0.0
    %127 = vmatprep.subr.mxu0 0.0
    %128 = vmatpush1.msra.mxu0 0.0
    %129 = vmatprep.mubr.f32.mxu0 0.0
    %130 = vmatmul.mubr.f32.gmra.mrb[0].mxu0 %v41
    %v131 = vpop.f32.mrb[0].mxu0
    %v132 = vadd.f32 %v63, %v131
    %v133 = vpop.f32.mrb[0].mxu0
    %134 = vdwg.mxu0
    %v135 = vmul.f32 %v132, 0.5
    %136 = vst [vmem:[#allocation7] sm:$0xff] %v135
    // Predicated region
    $region22: #{tpu_custom_call.1} parent=1 // pred_check
      _
    $region23: #{tpu_custom_call.1} parent=1 // pred_check_branch
      %138 = sbr.rel (0) target = $region25
    $region24: #{tpu_custom_call.1} parent=1 // pred_region
      %s140 = ssub.s32 128, 128
      %141 = vsyncadd [#allocation4], %s140
      %s143 = sshll.u32 [#allocation7], 4
      %s144 = int_to_ptr.vmem [resolvable:$true] %s143
      %146 = dma.vmem_to_hbm [thread:$0]  %s144, 128, %s3, [#allocation4]
    $region25: #{tpu_custom_call.1} parent=1 // pred_fallthru
      _
    // Predicated region
    $region26: #{tpu_custom_call.1} parent=1 // pred_check
      _
    $region27: #{tpu_custom_call.1} parent=1 // pred_check_branch
      %148 = sbr.rel (0) target = $region29
    $region28: #{tpu_custom_call.1} parent=1 // pred_region
      %149 = dma.done [#allocation4], 128
    $region29: #{tpu_custom_call.1} parent=1 // pred_fallthru
      _
    %150 = vsyncpa [#allocation3], 1
    %151 = vsyncpa [#allocation6], 1
    %152 = vsyncpa [#allocation4], 1

</llo_original>
